<compile_context>
chip_gen: v5e
topology: v5e:2x2
jax: 0.10.0
libtpu: 0.0.40
codegen_flags: <defaults>
</compile_context>

<pallas_src>
import functools
import math

import jax
import jax.numpy as jnp
from jax.experimental import pallas as pl
from jax.experimental.pallas import tpu as pltpu

# ---- small, MXU/lane-friendly hyper-parameters --------------------------
VOCAB = 64          # input_size
HIDDEN = 256        # hidden_size (d_model)
NUM_HEADS = 2       # nhead  -> head_dim = 128 (lane aligned)
NUM_LAYERS = 2
FFN_DIM = 512       # dim_feedforward
MAX_LENGTH = 15
SEQ_LEN = 8         # example sequence length (<= MAX_LENGTH)
BATCH = 2
LN_EPS = 1e-5
NEG_INF = -1e9


# ---------------------------------------------------------------------------
# Kernel 1: embedding gather + sqrt(H) scale + positional add
# ---------------------------------------------------------------------------
def _embed_kernel(tok_ref, emb_ref, pos_ref, out_ref, *, scale):
    # emb_ref / pos_ref / out_ref blocks are all (1, 1, H); the token id picked
    # the embedding row via the BlockSpec index_map (tok_ref is only used there).
    del tok_ref
    out_ref[...] = emb_ref[...].astype(jnp.float32) * scale + pos_ref[...]


# ---------------------------------------------------------------------------
# Kernel 2: the full encoder stack, grid = (num_layers,)
# ---------------------------------------------------------------------------
def _layer_norm(x, gamma, beta):
    mean = jnp.mean(x, axis=-1, keepdims=True)
    xc = x - mean
    var = jnp.mean(xc * xc, axis=-1, keepdims=True)
    return xc * jax.lax.rsqrt(var + LN_EPS) * gamma + beta


def _encoder_kernel(x_ref, bias_ref,
                    wqkv_ref, bqkv_ref, wo_ref, bo_ref, g1_ref, be1_ref,
                    w1_ref, b1_ref, w2_ref, b2_ref, g2_ref, be2_ref,
                    out_ref, *, seq_len, batch, num_heads, hidden):
    l = pl.program_id(0)

    # Seed the carried activation block (out block index is constant across the
    # layer axis, so it stays VMEM-resident and acts as the layer-to-layer carry).
    @pl.when(l == 0)
    def _():
        out_ref[...] = x_ref[...]

    S, B, H = seq_len, batch, hidden
    dh = H // num_heads
    x = out_ref[...]                                   # (B*S, H) f32

    # ---- multi-head self-attention --------------------------------------
    qkv = jnp.dot(x.astype(jnp.bfloat16), wqkv_ref[0],
                  preferred_element_type=jnp.float32) + bqkv_ref[0]   # (N, 3H)
    q = qkv[:, 0:H]
    k = qkv[:, H:2 * H]
    v = qkv[:, 2 * H:3 * H]
    scale = 1.0 / math.sqrt(dh)

    rows = []
    for b in range(B):                                 # static loops, tiny matmuls
        qb = q[b * S:(b + 1) * S, :]
        kb = k[b * S:(b + 1) * S, :]
        vb = v[b * S:(b + 1) * S, :]
        mb = bias_ref[b:b + 1, :]                      # (1, S) additive key mask
        heads = []
        for hh in range(num_heads):
            qh = (qb[:, hh * dh:(hh + 1) * dh] * scale).astype(jnp.bfloat16)
            kh = kb[:, hh * dh:(hh + 1) * dh].astype(jnp.bfloat16)
            vh = vb[:, hh * dh:(hh + 1) * dh].astype(jnp.bfloat16)
            s = jax.lax.dot_general(qh, kh, (((1,), (1,)), ((), ())),
                                    preferred_element_type=jnp.float32)  # (S, S)
            s = s + mb
            s = s - jnp.max(s, axis=-1, keepdims=True)
            p = jnp.exp(s)
            p = p / jnp.sum(p, axis=-1, keepdims=True)
            heads.append(jnp.dot(p.astype(jnp.bfloat16), vh,
                                 preferred_element_type=jnp.float32))    # (S, dh)
        rows.append(jnp.concatenate(heads, axis=-1))                     # (S, H)
    attn = jnp.concatenate(rows, axis=0)                                 # (N, H)

    attn = jnp.dot(attn.astype(jnp.bfloat16), wo_ref[0],
                   preferred_element_type=jnp.float32) + bo_ref[0]

    x = _layer_norm(x + attn, g1_ref[0], be1_ref[0])

    # ---- feed-forward ----------------------------------------------------
    h1 = jnp.dot(x.astype(jnp.bfloat16), w1_ref[0],
                 preferred_element_type=jnp.float32) + b1_ref[0]
    h1 = jnp.maximum(h1, 0.0)
    h2 = jnp.dot(h1.astype(jnp.bfloat16), w2_ref[0],
                 preferred_element_type=jnp.float32) + b2_ref[0]

    out_ref[...] = _layer_norm(x + h2, g2_ref[0], be2_ref[0])


# ---------------------------------------------------------------------------
# Wrapper
# ---------------------------------------------------------------------------
def transformer_encoder_forward(src, src_mask, params):
    """src: (S, B) int32 token ids; src_mask: (S, B) bool (True = padding).
    Returns (S, B, HIDDEN) float32 (torch seq-first layout)."""
    (emb3, pos3, wqkv, bqkv, wo, bo, g1, be1,
     w1, b1, w2, b2, g2, be2) = params
    S, B = src.shape
    N = S * B
    H = HIDDEN

    tok_flat = src.T.reshape(N).astype(jnp.int32)        # row n = b*S + s
    emb_scale = math.sqrt(float(H))

    # ---- stage 1: gather embedding rows via scalar-prefetch index_map ----
    x_embed = pl.pallas_call(
        functools.partial(_embed_kernel, scale=emb_scale),
        out_shape=jax.ShapeDtypeStruct((N, 1, H), jnp.float32),
        grid_spec=pltpu.PrefetchScalarGridSpec(
            num_scalar_prefetch=1,
            grid=(N,),
            in_specs=[
                pl.BlockSpec((1, 1, H), lambda i, tok: (tok[i], 0, 0)),
                pl.BlockSpec((1, 1, H), lambda i, tok: (i % S, 0, 0)),
            ],
            out_specs=pl.BlockSpec((1, 1, H), lambda i, tok: (i, 0, 0)),
        ),
        compiler_params=pltpu.CompilerParams(
            dimension_semantics=("arbitrary",)),
    )(tok_flat, emb3, pos3)

    x_in = x_embed.reshape(N, H)
    bias = jnp.where(src_mask.T, NEG_INF, 0.0).astype(jnp.float32)   # (B, S)

    const = lambda l: (0, 0)
    per_layer = lambda l: (l, 0, 0)

    kernel = functools.partial(_encoder_kernel, seq_len=S, batch=B,
                               num_heads=NUM_HEADS, hidden=H)

    # ---- stage 2: single launch over the whole layer stack ---------------
    out = pl.pallas_call(
        kernel,
        out_shape=jax.ShapeDtypeStruct((N, H), jnp.float32),
        grid_spec=pltpu.PrefetchScalarGridSpec(
            num_scalar_prefetch=0,
            grid=(NUM_LAYERS,),
            in_specs=[
                pl.BlockSpec((N, H), const),                 # activations in
                pl.BlockSpec((B, S), const),                 # additive key-pad mask
                pl.BlockSpec((1, H, 3 * H), per_layer),      # W_qkv  (bf16)
                pl.BlockSpec((1, 1, 3 * H), per_layer),      # b_qkv
                pl.BlockSpec((1, H, H), per_layer),          # W_out  (bf16)
                pl.BlockSpec((1, 1, H), per_layer),          # b_out
                pl.BlockSpec((1, 1, H), per_layer),          # ln1 gamma
                pl.BlockSpec((1, 1, H), per_layer),          # ln1 beta
                pl.BlockSpec((1, H, FFN_DIM), per_layer),    # W_ff1  (bf16)
                pl.BlockSpec((1, 1, FFN_DIM), per_layer),    # b_ff1
                pl.BlockSpec((1, FFN_DIM, H), per_layer),    # W_ff2  (bf16)
                pl.BlockSpec((1, 1, H), per_layer),          # b_ff2
                pl.BlockSpec((1, 1, H), per_layer),          # ln2 gamma
                pl.BlockSpec((1, 1, H), per_layer),          # ln2 beta
            ],
            out_specs=pl.BlockSpec((N, H), const),
        ),
        compiler_params=pltpu.CompilerParams(
            dimension_semantics=("arbitrary",)),
    )(x_in, bias, wqkv, bqkv, wo, bo, g1, be1, w1, b1, w2, b2, g2, be2)

    return out.reshape(B, S, H).transpose(1, 0, 2)       # (S, B, H)


# ---------------------------------------------------------------------------
# Parameters (layouts the kernels expect; weights pre-transposed, bf16)
# ---------------------------------------------------------------------------
def init_params(key):
    H, F, L = HIDDEN, FFN_DIM, NUM_LAYERS
    keys = jax.random.split(key, 10)
    bh = 1.0 / math.sqrt(H)
    bf = 1.0 / math.sqrt(F)

    def u(k, shape, bound):
        return jax.random.uniform(k, shape, jnp.float32, -bound, bound)

    emb = jax.random.normal(keys[0], (VOCAB, H), jnp.float32)            # nn.Embedding
    pos = 0.02 * jax.random.normal(keys[1], (MAX_LENGTH, H), jnp.float32)  # pos_encoder
    # (the torch module inits pos_encoder to zeros; random keeps the test non-trivial)

    wqkv = u(keys[2], (L, H, 3 * H), bh).astype(jnp.bfloat16)   # in_proj_weight.T
    bqkv = u(keys[3], (L, 1, 3 * H), bh)
    wo = u(keys[4], (L, H, H), bh).astype(jnp.bfloat16)         # out_proj.weight.T
    bo = u(keys[5], (L, 1, H), bh)
    g1 = jnp.ones((L, 1, H), jnp.float32)
    be1 = jnp.zeros((L, 1, H), jnp.float32)
    w1 = u(keys[6], (L, H, F), bh).astype(jnp.bfloat16)         # linear1.weight.T
    b1 = u(keys[7], (L, 1, F), bh)
    w2 = u(keys[8], (L, F, H), bf).astype(jnp.bfloat16)         # linear2.weight.T
    b2 = u(keys[9], (L, 1, H), bf)
    g2 = jnp.ones((L, 1, H), jnp.float32)
    be2 = jnp.zeros((L, 1, H), jnp.float32)

    emb3 = emb.astype(jnp.bfloat16).reshape(VOCAB, 1, H)
    pos3 = pos.reshape(MAX_LENGTH, 1, H)
    return (emb3, pos3, wqkv, bqkv, wo, bo, g1, be1, w1, b1, w2, b2, g2, be2)


# ---------------------------------------------------------------------------
# Pure-JAX reference of the torch forward (same bf16 matmul inputs, f32 accum)
# ---------------------------------------------------------------------------
def reference_forward(src, src_mask, params):
    (emb3, pos3, wqkv, bqkv, wo, bo, g1, be1,
     w1, b1, w2, b2, g2, be2) = params
    S, B = src.shape
    H = HIDDEN
    dh = H // NUM_HEADS
    scale = 1.0 / math.sqrt(dh)

    emb = emb3.reshape(VOCAB, H)
    pos = pos3.reshape(MAX_LENGTH, H)

    x = emb[src].astype(jnp.float32) * math.sqrt(float(H))       # (S, B, H)
    x = x + pos[:S][:, None, :]
    x = x.transpose(1, 0, 2)                                     # (B, S, H)
    bias = jnp.where(src_mask.T, NEG_INF, 0.0).astype(jnp.float32)

    def ln(y, gamma, beta):
        mu = jnp.mean(y, axis=-1, keepdims=True)
        yc = y - mu
        var = jnp.mean(yc * yc, axis=-1, keepdims=True)
        return yc * jax.lax.rsqrt(var + LN_EPS) * gamma + beta

    for l in range(NUM_LAYERS):
        qkv = jnp.einsum('bsh,hk->bsk', x.astype(jnp.bfloat16), wqkv[l],
                         preferred_element_type=jnp.float32) + bqkv[l]
        q, k, v = qkv[..., :H], qkv[..., H:2 * H], qkv[..., 2 * H:]

        def heads(t):
            return t.reshape(B, S, NUM_HEADS, dh).transpose(0, 2, 1, 3)

        qh = (heads(q) * scale).astype(jnp.bfloat16)
        kh = heads(k).astype(jnp.bfloat16)
        vh = heads(v).astype(jnp.bfloat16)
        s = jnp.einsum('bnqd,bnkd->bnqk', qh, kh,
                       preferred_element_type=jnp.float32)
        s = s + bias[:, None, None, :]
        s = s - jnp.max(s, axis=-1, keepdims=True)
        p = jnp.exp(s)
        p = p / jnp.sum(p, axis=-1, keepdims=True)
        o = jnp.einsum('bnqk,bnkd->bnqd', p.astype(jnp.bfloat16), vh,
                       preferred_element_type=jnp.float32)
        o = o.transpose(0, 2, 1, 3).reshape(B, S, H)
        attn = jnp.einsum('bsh,hk->bsk', o.astype(jnp.bfloat16), wo[l],
                          preferred_element_type=jnp.float32) + bo[l]
        x = ln(x + attn, g1[l], be1[l])
        hmid = jnp.maximum(
            jnp.einsum('bsh,hf->bsf', x.astype(jnp.bfloat16), w1[l],
                       preferred_element_type=jnp.float32) + b1[l], 0.0)
        ff = jnp.einsum('bsf,fh->bsh', hmid.astype(jnp.bfloat16), w2[l],
                        preferred_element_type=jnp.float32) + b2[l]
        x = ln(x + ff, g2[l], be2[l])

    return x.transpose(1, 0, 2)                                  # (S, B, H)


if __name__ == "__main__":
    key = jax.random.PRNGKey(0)
    kp, kt = jax.random.split(key)
    params = init_params(kp)

    src = jax.random.randint(kt, (SEQ_LEN, BATCH), 0, VOCAB, dtype=jnp.int32)
    # key-padding mask in the torch forward layout (S, B); last 2 tokens of
    # batch item 1 are padding.
    src_mask = jnp.zeros((SEQ_LEN, BATCH), dtype=jnp.bool_).at[-2:, 1].set(True)

    out = transformer_encoder_forward(src, src_mask, params)
    out = jax.block_until_ready(out)

    ref = reference_forward(src, src_mask, params)
    assert out.shape == (SEQ_LEN, BATCH, HIDDEN)
    assert bool(jnp.all(jnp.isfinite(out)))
    max_err = float(jnp.max(jnp.abs(out - ref)))
    assert jnp.allclose(out, ref, atol=2e-3, rtol=2e-3), f"max |err| = {max_err}"

    print("KERNEL_OK")
</pallas_src>

<mosaic_0001>
module attributes {stable_mosaic.version = 11 : i64} {
  func.func @_embed_kernel(%arg0: i32, %arg1: memref<16xi32, #tpu.memory_space<smem>>, %arg2: memref<1x1x256xbf16, #tpu.memory_space<vmem>>, %arg3: memref<1x1x256xf32, #tpu.memory_space<vmem>>, %arg4: memref<1x1x256xf32, #tpu.memory_space<vmem>>) attributes {dimension_semantics = [#tpu.dimension_semantics<arbitrary>], iteration_bounds = array<i64: 16>, scalar_prefetch = 1 : i64, scratch_operands = 0 : i64, tpu.core_type = #tpu.core_type<tc>, window_params = [{transform_indices = @transform_0, window_bounds = array<i64: 1, 1, 256>}, {transform_indices = @transform_1, window_bounds = array<i64: 1, 1, 256>}, {transform_indices = @transform_2, window_bounds = array<i64: 1, 1, 256>}]} {
    %c0 = arith.constant 0 : index
    %c0_0 = arith.constant 0 : index
    %c0_1 = arith.constant 0 : index
    %0 = vector.load %arg2[%c0, %c0_0, %c0_1] : memref<1x1x256xbf16, #tpu.memory_space<vmem>>, vector<1x1x256xbf16>
    %1 = arith.extf %0 : vector<1x1x256xbf16> to vector<1x1x256xf32>
    %cst = arith.constant 1.600000e+01 : f32
    %2 = vector.broadcast %cst : f32 to vector<1x1x256xf32>
    %3 = arith.mulf %1, %2 : vector<1x1x256xf32>
    %c0_2 = arith.constant 0 : index
    %c0_3 = arith.constant 0 : index
    %c0_4 = arith.constant 0 : index
    %4 = vector.load %arg3[%c0_2, %c0_3, %c0_4] : memref<1x1x256xf32, #tpu.memory_space<vmem>>, vector<1x1x256xf32>
    %5 = arith.addf %3, %4 : vector<1x1x256xf32>
    %c0_5 = arith.constant 0 : index
    %c0_6 = arith.constant 0 : index
    %c0_7 = arith.constant 0 : index
    %6 = vector.load %arg4[%c0_5, %c0_6, %c0_7] : memref<1x1x256xf32, #tpu.memory_space<vmem>>, vector<1x1x256xf32>
    tpu.vector_store %arg4[%c0_5, %c0_6, %c0_7], %5 {strides = array<i32>} : memref<1x1x256xf32, #tpu.memory_space<vmem>>, vector<1x1x256xf32>,
    return
  }
  func.func @transform_0(%arg0: i32, %arg1: memref<16xi32, #tpu.memory_space<smem>>) -> (i32, i32, i32) {
    %0 = arith.index_cast %arg0 : i32 to index
    %1 = memref.load %arg1[%0] : memref<16xi32, #tpu.memory_space<smem>>
    %c0_i32 = arith.constant 0 : i32
    %c0_i32_0 = arith.constant 0 : i32
    %c0_i32_1 = arith.constant 0 : i32
    return %1, %c0_i32, %c0_i32_0 : i32, i32, i32
  }
  func.func @transform_1(%arg0: i32, %arg1: memref<16xi32, #tpu.memory_space<smem>>) -> (i32, i32, i32) {
    %c8_i32 = arith.constant 8 : i32
    %c0_i32 = arith.constant 0 : i32
    %0 = arith.cmpi eq, %c8_i32, %c0_i32 : i32
    %c1_i32 = arith.constant 1 : i32
    %1 = arith.select %0, %c1_i32, %c8_i32 : i32
    %2 = arith.remsi %arg0, %1 : i32
    %c0_i32_0 = arith.constant 0 : i32
    %3 = arith.cmpi ne, %2, %c0_i32_0 : i32
    %c0_i32_1 = arith.constant 0 : i32
    %4 = arith.cmpi slt, %2, %c0_i32_1 : i32
    %c0_i32_2 = arith.constant 0 : i32
    %5 = arith.cmpi slt, %1, %c0_i32_2 : i32
    %6 = arith.xori %4, %5 : i1
    %7 = arith.andi %6, %3 : i1
    %8 = arith.addi %2, %1 : i32
    %9 = arith.select %7, %8, %2 : i32
    %c0_i32_3 = arith.constant 0 : i32
    %c0_i32_4 = arith.constant 0 : i32
    %c0_i32_5 = arith.constant 0 : i32
    return %9, %c0_i32_3, %c0_i32_4 : i32, i32, i32
  }
  func.func @transform_2(%arg0: i32, %arg1: memref<16xi32, #tpu.memory_space<smem>>) -> (i32, i32, i32) {
    %c0_i32 = arith.constant 0 : i32
    %c0_i32_0 = arith.constant 0 : i32
    %c0_i32_1 = arith.constant 0 : i32
    return %arg0, %c0_i32, %c0_i32_0 : i32, i32, i32
  }
}

</mosaic_0001>

<llo_original>
// kernel: tpu_custom_call.1
$region0: #{tpu_custom_call.1}
  #allocation0 [shape = 'u32[]', space=smem, size = 0x4, offset = 0x4, fixed_abs, tag = 'smem constant byte address 0x4 - core index']
  #allocation1 [shape = 'u32[72,128]{1,0:T(1,128)}', space=vmem, size = 0x9000, scoped, tag = 'internal scratch']
  #allocation2 [shape = 's32[1]{0}', space=sflag, size = 0x4, scoped, tag = 'scoped memory for tpu_custom_call.1']
  #allocation3 [shape = 'u8[512]{0}', space=smem, size = 0x200, scoped, tag = 'prefetched SMEM operand 0']
  %s0 = inlined_call_operand.vmem [shape: s32[16], index: 0, kind: input, shape index: {}]
  %s1 = inlined_call_operand.vmem [shape: bf16[64,1,256], index: 1, kind: input, shape index: {}]
  %s2 = inlined_call_operand.vmem [shape: f32[15,1,256], index: 2, kind: input, shape index: {}]
  %s3 = inlined_call_operand.hbm [shape: f32[16,1,256], index: 3, kind: output, shape index: {}]
  %s4 = sld [smem:[#allocation0]]
  $region41: #{tpu_custom_call.1} parent=0
    _
  %s6 = ssub.s32 1, %s4
  %s7 = scalar_select 0, %s6, %s4
  %s9 = sshll.u32 %s0, 4
  %s10 = int_to_ptr.vmem [resolvable:$true] %s9
  %12 = dma.vmem_to_smem %s10, 16, [#allocation3], [#allocation2]
  %14 = dma.done [#allocation2], 16
  %15 = sfence
  $region1: #{tpu_custom_call.1} parent=0
    #allocation4 [shape = 'u8[2048]{0}', space=vmem, size = 0x800, scoped, tag = 'output window, operand 0']
    #allocation5 [shape = 's32[2]{0}', space=sflag, size = 0x8, scoped, tag = 'scoped memory for tpu_custom_call.1']
    %16 = vsyncpa [#allocation5], 0
    %s17 = scalar_lea.sflag [#allocation5], 1
    %18 = vsyncpa %s17, 0
    loop: start=0, step=1, limit=18
    $region2: #{tpu_custom_call.1} parent=1 // loop_pre_header
      _
    $region3: #{tpu_custom_call.1} parent=1 // loop_header
      %s20 = sphi 0, %s24
      %p21 = scmp.ge.s32.totalorder %s20, 18
      %s32 = sphi 0, %s34
      %s35 = sphi 0, %s32
      %s36 = sphi 0, %s35
      %s52 = sphi 0, %s36
      %s82 = sphi 0, %s84
      %s85 = sphi 0, %s82
      %s86 = sphi 0, %s85
      %s102 = sphi 0, %s86
      %s108 = sphi 0, %s110
      %s111 = sphi 0, %s108
      %s112 = sphi 0, %s111
      %s128 = sphi 0, %s112
    $region4: #{tpu_custom_call.1} parent=1 // loop_header_branch
      %23 = sbr.rel (%p21) target = $region8
    $region5: #{tpu_custom_call.1} parent=1 // loop_body
      %s25 = ssub.s32 %s20, 1
      %s26 = ssub.s32 %s20, 2
      %s27 = sadd.s32 %s20, 1
      %s28 = sld [smem:[#allocation3 + %s20]]
      %s29 = sld [smem:[#allocation3 + %s27]]
      %s30 = ssub.s32 %s28, %s29
      %p31 = scmp.eq.s32.totalorder %s30, 0
      %s33 = sadd.s32 %s32, 1
      %s34 = scalar_select %p31, %s32, %s33
      %p37 = pneg %p31
      %p38 = scmp.eq.s32.totalorder %s20, 15
      %p39 = por %p37, %p38
      %p40 = scmp.ne.s32.totalorder %s32, %s35
      %p41 = scmp.eq.s32.totalorder %s20, 0
      %p42 = por %p40, %p41
      %p43 = scmp.ne.s32.totalorder %s32, %s35
      %p44 = scmp.eq.s32.totalorder %s25, 15
      %p45 = por %p43, %p44
      %p46 = scmp.ne.s32.totalorder %s35, %s36
      %p47 = scmp.eq.s32.totalorder %s25, 0
      %p48 = por %p46, %p47
      %p49 = scmp.ne.s32.totalorder %s35, %s36
      %p50 = scmp.eq.s32.totalorder %s26, 15
      %p51 = por %p49, %p50
      %p53 = scmp.ne.s32.totalorder %s36, %s52
      %p54 = scmp.eq.s32.totalorder %s26, 0
      %p55 = por %p53, %p54
      %p56 = scmp.lt.s32.totalorder %s20, 0
      %s57 = ssub.s32 0, %s20
      %s58 = scalar_select %p56, %s57, %s20
      %s59 = sand.u32 %s58, 7
      %s60 = ssub.s32 0, %s59
      %s61 = scalar_select %p56, %s60, %s59
      %p62 = scmp.ne.s32.totalorder %s61, 0
      %p63 = scmp.lt.s32.totalorder %s61, 0
      %p64 = pnand %p63, %p62
      %p65 = pneg %p64
      %s66 = sadd.s32 %s61, 8
      %s67 = scalar_select %p65, %s66, %s61
      %p68 = scmp.lt.s32.totalorder %s27, 0
      %s69 = ssub.s32 0, %s27
      %s70 = scalar_select %p68, %s69, %s27
      %s71 = sand.u32 %s70, 7
      %s72 = ssub.s32 0, %s71
      %s73 = scalar_select %p68, %s72, %s71
      %p74 = scmp.ne.s32.totalorder %s73, 0
      %p75 = scmp.lt.s32.totalorder %s73, 0
      %p76 = pnand %p75, %p74
      %p77 = pneg %p76
      %s78 = sadd.s32 %s73, 8
      %s79 = scalar_select %p77, %s78, %s73
      %s80 = ssub.s32 %s67, %s79
      %p81 = scmp.eq.s32.totalorder %s80, 0
      %s83 = sadd.s32 %s82, 1
      %s84 = scalar_select %p81, %s82, %s83
      %p87 = pneg %p81
      %p88 = scmp.eq.s32.totalorder %s20, 15
      %p89 = por %p87, %p88
      %p90 = scmp.ne.s32.totalorder %s82, %s85
      %p91 = scmp.eq.s32.totalorder %s20, 0
      %p92 = por %p90, %p91
      %p93 = scmp.ne.s32.totalorder %s82, %s85
      %p94 = scmp.eq.s32.totalorder %s25, 15
      %p95 = por %p93, %p94
      %p96 = scmp.ne.s32.totalorder %s85, %s86
      %p97 = scmp.eq.s32.totalorder %s25, 0
      %p98 = por %p96, %p97
      %p99 = scmp.ne.s32.totalorder %s85, %s86
      %p100 = scmp.eq.s32.totalorder %s26, 15
      %p101 = por %p99, %p100
      %p103 = scmp.ne.s32.totalorder %s86, %s102
      %p104 = scmp.eq.s32.totalorder %s26, 0
      %p105 = por %p103, %p104
      %s106 = ssub.s32 %s20, %s27
      %p107 = scmp.eq.s32.totalorder %s106, 0
      %s109 = sadd.s32 %s108, 1
      %s110 = scalar_select %p107, %s108, %s109
      %p113 = pneg %p107
      %p114 = scmp.eq.s32.totalorder %s20, 15
      %p115 = por %p113, %p114
      %p116 = scmp.ne.s32.totalorder %s108, %s111
      %p117 = scmp.eq.s32.totalorder %s20, 0
      %p118 = por %p116, %p117
      %p119 = scmp.ne.s32.totalorder %s108, %s111
      %p120 = scmp.eq.s32.totalorder %s25, 15
      %p121 = por %p119, %p120
      %p122 = scmp.ne.s32.totalorder %s111, %s112
      %p123 = scmp.eq.s32.totalorder %s25, 0
      %p124 = por %p122, %p123
      %p125 = scmp.ne.s32.totalorder %s111, %s112
      %p126 = scmp.eq.s32.totalorder %s26, 15
      %p127 = por %p125, %p126
      %p129 = scmp.ne.s32.totalorder %s112, %s128
      %p130 = scmp.eq.s32.totalorder %s26, 0
      %p131 = por %p129, %p130
      %p132 = scmp.le.s32.totalorder 1, %s20
      %p133 = scmp.lt.s32.totalorder %s20, 17
      %p134 = pnand %p132, %p133
      %p135 = pneg %p134
      // Predicated region
      $region9: #{tpu_custom_call.1} parent=5 // pred_check
        _
      $region10: #{tpu_custom_call.1} parent=5 // pred_check_branch
        %137 = sbr.rel (%p134) target = $region12
      $region11: #{tpu_custom_call.1} parent=5 // pred_region
        %s138 = ssub.s32 %s20, 1
      $region12: #{tpu_custom_call.1} parent=5 // pred_fallthru
        _
      %p139 = scmp.lt.s32.totalorder %s20, 16
      // Predicated region
      $region13: #{tpu_custom_call.1} parent=5 // pred_check
        %p140 = pneg %p139
      $region14: #{tpu_custom_call.1} parent=5 // pred_check_branch
        %142 = sbr.rel (%p140) target = $region16
      $region15: #{tpu_custom_call.1} parent=5 // pred_region
        // Predicated region
        $region17: #{tpu_custom_call.1} parent=15 // pred_check
          %p143 = pneg %p42
        $region18: #{tpu_custom_call.1} parent=15 // pred_check_branch
          %145 = sbr.rel (%p143) target = $region20
        $region19: #{tpu_custom_call.1} parent=15 // pred_region
          %s146 = sld [smem:[#allocation3 + %s20]]
          %p147 = scmp.lt.s32.totalorder %s146, 63
          %s148 = scalar_select %p147, %s146, 63
          %s149 = smul.addr %s148, 2
          %s150 = scalar_lea.vmem %s1, %s149
          %s151 = sld [smem:[#allocation3 + %s20]]
        $region20: #{tpu_custom_call.1} parent=15 // pred_fallthru
          _
        // Predicated region
        $region21: #{tpu_custom_call.1} parent=15 // pred_check
          %p152 = pneg %p92
        $region22: #{tpu_custom_call.1} parent=15 // pred_check_branch
          %154 = sbr.rel (%p152) target = $region24
        $region23: #{tpu_custom_call.1} parent=15 // pred_region
          %p155 = scmp.lt.s32.totalorder %s20, 0
          %s156 = ssub.s32 0, %s20
          %s157 = scalar_select %p155, %s156, %s20
          %s158 = sand.u32 %s157, 7
          %s159 = ssub.s32 0, %s158
          %s160 = scalar_select %p155, %s159, %s158
          %p161 = scmp.ne.s32.totalorder %s160, 0
          %p162 = scmp.lt.s32.totalorder %s160, 0
          %p163 = pnand %p162, %p161
          %p164 = pneg %p163
          %s165 = sadd.s32 %s160, 8
          %s166 = scalar_select %p164, %s165, %s160
          %p167 = scmp.lt.s32.totalorder %s166, 14
          %s168 = scalar_select %p167, %s166, 14
          %s169 = smul.addr %s168, 2
          %s170 = scalar_lea.vmem %s2, %s169
          %p171 = scmp.lt.s32.totalorder %s20, 0
          %s172 = ssub.s32 0, %s20
          %s173 = scalar_select %p171, %s172, %s20
          %s174 = sand.u32 %s173, 7
          %s175 = ssub.s32 0, %s174
          %s176 = scalar_select %p171, %s175, %s174
          %p177 = scmp.ne.s32.totalorder %s176, 0
          %p178 = scmp.lt.s32.totalorder %s176, 0
          %p179 = pnand %p178, %p177
          %p180 = pneg %p179
          %s181 = sadd.s32 %s176, 8
          %s182 = scalar_select %p180, %s181, %s176
        $region24: #{tpu_custom_call.1} parent=15 // pred_fallthru
          _
      $region16: #{tpu_custom_call.1} parent=5 // pred_fallthru
        _
      %p183 = scmp.le.s32.totalorder 1, %s20
      %p184 = scmp.lt.s32.totalorder %s20, 17
      %p185 = pnand %p183, %p184
      %p186 = pneg %p185
      // Predicated region
      $region25: #{tpu_custom_call.1} parent=5 // pred_check
        _
      $region26: #{tpu_custom_call.1} parent=5 // pred_check_branch
        %188 = sbr.rel (%p185) target = $region28
      $region27: #{tpu_custom_call.1} parent=5 // pred_region
        %s189 = ssub.s32 %s20, 1
        %s190 = sld [smem:[#allocation3 + %s25]]
        %p191 = scmp.lt.s32.totalorder %s190, 63
        %s192 = scalar_select %p191, %s190, 63
        %s193 = smul.addr %s192, 2
        %s194 = scalar_lea.vmem %s1, %s193
        %p195 = pneg %p48
        %p196 = pneg %p45
        %p197 = scmp.lt.s32.totalorder %s25, 0
        %s198 = ssub.s32 0, %s25
        %s199 = scalar_select %p197, %s198, %s25
        %s200 = sand.u32 %s199, 7
        %s201 = ssub.s32 0, %s200
        %s202 = scalar_select %p197, %s201, %s200
        %p203 = scmp.ne.s32.totalorder %s202, 0
        %p204 = scmp.lt.s32.totalorder %s202, 0
        %p205 = pnand %p204, %p203
        %p206 = pneg %p205
        %s207 = sadd.s32 %s202, 8
        %s208 = scalar_select %p206, %s207, %s202
        %p209 = scmp.lt.s32.totalorder %s208, 14
        %s210 = scalar_select %p209, %s208, 14
        %s211 = smul.addr %s210, 2
        %s212 = scalar_lea.vmem %s2, %s211
        %p213 = pneg %p98
        %p214 = pneg %p95
        %p215 = pneg %p124
        %p216 = pneg %p121
        %s217 = sand.u32 %s111, 1
        %s218 = scalar_lea.sflag [#allocation5], %s217
        %s219 = sand.u32 %s111, 1
        %s220 = smul.addr %s219, 2
        %s221 = scalar_lea.vmem [#allocation4], %s220
        %s222 = sld [smem:[#allocation3 + %s25]]
        %p223 = scmp.lt.s32.totalorder %s222, 63
        %s224 = scalar_select %p223, %s222, 63
        %s225 = smul.addr %s224, 2
        %s226 = scalar_lea.vmem %s1, %s225
        %s227 = sld [smem:[#allocation3 + %s25]]
        %p228 = scmp.lt.s32.totalorder %s25, 0
        %s229 = ssub.s32 0, %s25
        %s230 = scalar_select %p228, %s229, %s25
        %s231 = sand.u32 %s230, 7
        %s232 = ssub.s32 0, %s231
        %s233 = scalar_select %p228, %s232, %s231
        %p234 = scmp.ne.s32.totalorder %s233, 0
        %p235 = scmp.lt.s32.totalorder %s233, 0
        %p236 = pnand %p235, %p234
        %p237 = pneg %p236
        %s238 = sadd.s32 %s233, 8
        %s239 = scalar_select %p237, %s238, %s233
        %p240 = scmp.lt.s32.totalorder %s239, 14
        %s241 = scalar_select %p240, %s239, 14
        %s242 = smul.addr %s241, 2
        %s243 = scalar_lea.vmem %s2, %s242
        %p244 = scmp.lt.s32.totalorder %s25, 0
        %s245 = ssub.s32 0, %s25
        %s246 = scalar_select %p244, %s245, %s25
        %s247 = sand.u32 %s246, 7
        %s248 = ssub.s32 0, %s247
        %s249 = scalar_select %p244, %s248, %s247
        %p250 = scmp.ne.s32.totalorder %s249, 0
        %p251 = scmp.lt.s32.totalorder %s249, 0
        %p252 = pnand %p251, %p250
        %p253 = pneg %p252
        %s254 = sadd.s32 %s249, 8
        %s255 = scalar_select %p253, %s254, %s249
        %v256 = vld [vmem:[%s226] sm:$0x3]
        %v257 = vunpack.c.l.bf16 %v256
        %v258 = vmul.f32 %v257, 16.0
        %v259 = vld [vmem:[%s243] sm:$0x3]
        %v262 = vunpack.c.l.s4 857870592
        %v263 = vunpack.c.0.s8 %v262
        %v264 = vperm.slane %v259, %v263
        %v266 = vadd.f32 %v258, %v264
        %v268 = vrot.slane %v266, 1
        %v269 = vrot.slane %v266, 2
        %v270 = vrot.slane %v266, 3
        %vm271 = vcmask 1040384
        %v272 = vsel %vm271, %v266, %v268
        %vm273 = vcmask 1042434
        %v274 = vsel %vm273, %v269, %v270
        %vm275 = vcmask 1041408
        %v276 = vsel %vm275, %v272, %v274
        %v278 = vlaneseq
        %vm279 = vcmp.ge.s32.totalorder %v278, 0
        %vm280 = vcmp.lt.s32.totalorder %v278, 256
        %vm281 = vmand %vm279, %vm280
        %282 = vst.msk [vmem:[%s221] sm:$0x3] %vm281, %v276
        %s283 = sand.u32 %s111, 1
        %s284 = scalar_lea.sflag [#allocation5], %s283
        %s285 = sand.u32 %s111, 1
        %s286 = smul.addr %s285, 2
        %s287 = scalar_lea.vmem [#allocation4], %s286
        // Predicated region
        $region29: #{tpu_custom_call.1} parent=27 // pred_check
          %p288 = pneg %p121
        $region30: #{tpu_custom_call.1} parent=27 // pred_check_branch
          %290 = sbr.rel (%p288) target = $region32
        $region31: #{tpu_custom_call.1} parent=27 // pred_region
          %292 = vsyncadd %s284, 0
          %s293 = smul.addr %s25, 2
          %s294 = scalar_lea.hbm %s3, %s293
          %s296 = sshll.u32 %s287, 4
          %s297 = int_to_ptr.vmem [resolvable:$true] %s296
          %s298 = sshll.u32 %s294, 4
          %s299 = int_to_ptr.hbm [resolvable:$true] %s298
          %301 = dma.vmem_to_hbm [thread:$0]  %s297, 32, %s299, %s284
        $region32: #{tpu_custom_call.1} parent=27 // pred_fallthru
          _
      $region28: #{tpu_custom_call.1} parent=5 // pred_fallthru
        _
      %p302 = scmp.le.s32.totalorder 2, %s20
      // Predicated region
      $region33: #{tpu_custom_call.1} parent=5 // pred_check
        %p303 = pneg %p302
      $region34: #{tpu_custom_call.1} parent=5 // pred_check_branch
        %305 = sbr.rel (%p303) target = $region36
      $region35: #{tpu_custom_call.1} parent=5 // pred_region
        %s306 = ssub.s32 %s20, 2
        // Predicated region
        $region37: #{tpu_custom_call.1} parent=35 // pred_check
          %p307 = pneg %p127
        $region38: #{tpu_custom_call.1} parent=35 // pred_check_branch
          %309 = sbr.rel (%p307) target = $region40
        $region39: #{tpu_custom_call.1} parent=35 // pred_region
          %s310 = sand.u32 %s112, 1
          %s311 = scalar_lea.sflag [#allocation5], %s310
          %s312 = sand.u32 %s112, 1
          %s313 = smul.addr %s312, 2
          %s314 = scalar_lea.vmem [#allocation4], %s313
          %316 = dma.done %s311, 32
        $region40: #{tpu_custom_call.1} parent=35 // pred_fallthru
          _
      $region36: #{tpu_custom_call.1} parent=5 // pred_fallthru
        _
    $region6: #{tpu_custom_call.1} parent=1 // loop_footer
      %s24 = sadd.s32 1, %s20
    $region7: #{tpu_custom_call.1} parent=1 // loop_footer_branch
      %19 = sbr.rel target = $region3
    $region8: #{tpu_custom_call.1} parent=1 // loop_exit
      _
    %317 = vsyncpa [#allocation5], 1
    %s318 = scalar_lea.sflag [#allocation5], 1
    %319 = vsyncpa %s318, 1

</llo_original>
